<compile_context>
chip_gen: v6e
topology: v6e:2x2x1
jax: 0.10.0
libtpu: 0.0.40
codegen_flags: <defaults>
</compile_context>

<pallas_src>
import jax
import jax.numpy as jnp
from jax.experimental import pallas as pl
from jax.experimental.pallas import tpu as pltpu


# ----------------------------------------------------------------------------------------------
# Fused kernel: one (batch, m-tile, n-tile) grid step.
# ----------------------------------------------------------------------------------------------
def _fused_kernel(x_ref, kb_ref, wkb_ref, fkt_ref, bias_ref, out_ref, x1_acc):
    """
    x_ref   : (1, n_tile, O*C)          n-tile of x[b]                    (compute dtype)
    kb_ref  : (1, m_tile, n_tile*O*K)   (m, n)-tile of kernel_basis[b]    (compute dtype)
    wkb_ref : (O*K, O*C)                blockdiag_o(w_kernel.T), resident (compute dtype)
    fkt_ref : (O*C, P*D)                corner-turned fiber kernel * 1/(C*D), resident (f32)
    bias_ref: (1, P*D)                  bias tiled over p, resident (f32)
    out_ref : (1, m_tile, P*D)          output slab (written on the last n-tile)
    x1_acc  : (m_tile, O*C) f32 VMEM    accumulator for x1[b, m-tile]
    """
    nt = pl.program_id(2)
    n_tile = x_ref.shape[1]
    ok, oc = wkb_ref.shape

    # XW[(n,o',k),(o,c)] = delta(o,o') * Wk[c,k] * x[b,n,o,c], built in-register.
    # O*K is a multiple of 8 in practice, so the (n, O*K) sublane merge below is layout-free.
    xw = (wkb_ref[...][None, :, :] * x_ref[0][:, None, :]).reshape(n_tile * ok, oc)

    # x1[m,(o,c)] (+)= sum_{n,o',k} KB[b,m,(n,o',k)] * XW[(n,o',k),(o,c)]  (one deep MXU dot)
    x1_part = jnp.dot(kb_ref[0], xw, preferred_element_type=jnp.float32)

    @pl.when(nt == 0)
    def _init():
        x1_acc[...] = x1_part

    @pl.when(nt > 0)
    def _accum():
        x1_acc[...] += x1_part

    @pl.when(nt == pl.num_programs(2) - 1)
    def _finalize():
        # x2[m,(p,d)] = sum_{(o,c)} x1[m,(o,c)] * FKT[(o,c),(p,d)]   (1/(C*D) folded into FKT)
        x2 = jnp.dot(x1_acc[...], fkt_ref[...], preferred_element_type=jnp.float32)
        out_ref[0] = (x2 + bias_ref[...]).astype(out_ref.dtype)


# ----------------------------------------------------------------------------------------------
# VMEM budgeting / tile selection.
# ----------------------------------------------------------------------------------------------
def _vmem_budget():
    """Returns (physical_vmem_capacity, soft_limit) in bytes, with a conservative fallback."""
    cap = None
    try:
        info = pltpu.get_tpu_info()
        cap = getattr(info, "vmem_capacity_bytes", None)
    except Exception:
        cap = None
    if not cap or cap <= 0:
        cap = 64 * 1024 * 1024  # v7x per-TensorCore VMEM: the smallest of v5e/v6e/v7x
    soft_limit = min(int(cap * 0.8), 100 * 1024 * 1024)
    return cap, soft_limit


def _estimate_vmem(m_t, n_t, O, K, C, P, D, in_bytes):
    kb = 2 * m_t * n_t * O * K * in_bytes          # double-buffered kernel_basis block
    xb = 2 * n_t * O * C * in_bytes                # double-buffered x block
    xw = n_t * O * K * O * C * in_bytes            # in-kernel XW temporary
    acc = m_t * O * C * 4                          # f32 accumulator
    ob = 2 * m_t * P * D * 4                       # double-buffered output block
    par = 2 * (O * K * O * C * in_bytes + O * C * P * D * 4 + P * D * 4)  # resident params
    return kb + xb + xw + acc + ob + par


def _select_tiles(B, M, N, O, K, C, P, D, in_bytes, budget, m_tile=None, n_tile=None):
    """Pick the largest legal (m_tile, n_tile) that fits the VMEM budget."""
    def div_desc(n):
        return [d for d in range(n, 0, -1) if n % d == 0]

    def m_legal(m):
        return M % m == 0 and (m == M or m % 8 == 0)

    def n_legal(n):
        return N % n == 0 and (n == N or (n % 8 == 0 and (n * O * K) % 128 == 0))

    if m_tile is not None and not m_legal(m_tile):
        raise ValueError(f"illegal m_tile={m_tile} for M={M} (must divide M and be M or a multiple of 8)")
    if n_tile is not None and not n_legal(n_tile):
        raise ValueError(
            f"illegal n_tile={n_tile} for N={N}, O={O}, K={K} "
            "(must divide N and be N, or a multiple of 8 with n_tile*O*K a multiple of 128)")

    m_cands = [m_tile] if m_tile is not None else [m for m in div_desc(M) if m_legal(m)]
    n_cands = [n_tile] if n_tile is not None else [n for n in div_desc(N) if n_legal(n)]

    fitting = [(m, n) for m in m_cands for n in n_cands
               if _estimate_vmem(m, n, O, K, C, P, D, in_bytes) <= budget]
    if fitting:
        def score(mn):
            m, n = mn
            # 1) keep >=2 parallel programs (both v7x TCs busy even at B==1),
            # 2) biggest block that fits (HBM-roofline / per-step overhead),
            # 3) prefer larger m_tile (fewer x re-reads and XW rebuilds).
            return (min(B * (M // m), 2), m * n, m)
        m_sel, n_sel = max(fitting, key=score)
    else:
        # nothing fits the soft budget: take the smallest legal tiles and let the raised
        # vmem_limit_bytes cover the difference (or fail loudly at compile time).
        m_sel, n_sel = min(m_cands), min(n_cands)
    return m_sel, n_sel, _estimate_vmem(m_sel, n_sel, O, K, C, P, D, in_bytes)


# ----------------------------------------------------------------------------------------------
# Wrapper.
# ----------------------------------------------------------------------------------------------
def separable_fiber_bundle_conv_fc(x, kernel_basis, fiber_kernel_basis,
                                   w_kernel, w_fiber, bias,
                                   m_tile=None, n_tile=None, use_bf16_inputs=False):
    B, N, O, C = x.shape
    _, M, _, _, K = kernel_basis.shape
    P = fiber_kernel_basis.shape[0]
    D = bias.shape[0]
    f32 = jnp.float32
    cdt = jnp.bfloat16 if use_bf16_inputs else f32
    in_bytes = 2 if use_bf16_inputs else 4

    cap, soft_limit = _vmem_budget()
    m_tile, n_tile, est_bytes = _select_tiles(
        B, M, N, O, K, C, P, D, in_bytes, int(soft_limit * 0.85),
        m_tile=m_tile, n_tile=n_tile)
    vmem_limit = int(min(int(cap * 0.9), max(soft_limit, est_bytes + (4 << 20))))

    # ---- tiny parameter prep (plain XLA; nothing batch-sized is materialized) ----
    # block-diagonal kernel weight: WKB[(o,k),(o',c)] = delta(o,o') * w_kernel[c,k]
    wk_blk = jnp.kron(jnp.eye(O, dtype=f32), w_kernel.T.astype(f32)).astype(cdt)    # (O*K, O*C)
    # fiber kernel Linear + corner turn (p,o,d,c) -> ((o,c),(p,d)), with 1/(C*D) folded in
    fk = jnp.dot(fiber_kernel_basis.reshape(P * O, K).astype(f32),
                 w_fiber.T.astype(f32))                                             # (P*O, D*C)
    fkt = (fk.reshape(P, O, D, C).transpose(1, 3, 0, 2).reshape(O * C, P * D)
           * (1.0 / (C * D))).astype(f32)                                           # (O*C, P*D)
    bias_row = jnp.tile(bias.astype(f32), (P,)).reshape(1, P * D)                   # idx p*D+d -> bias[d]

    # pure row-major reshapes of the big operands (no copy) + optional bf16 cast
    x2d = x.reshape(B, N, O * C).astype(cdt)
    kb3 = kernel_basis.reshape(B, M, N * O * K).astype(cdt)

    grid = (B, M // m_tile, N // n_tile)

    out = pl.pallas_call(
        _fused_kernel,
        out_shape=jax.ShapeDtypeStruct((B, M, P * D), f32),
        grid_spec=pltpu.PrefetchScalarGridSpec(
            num_scalar_prefetch=0,
            grid=grid,
            in_specs=[
                pl.BlockSpec((1, n_tile, O * C), lambda b, m, n: (b, n, 0)),            # x
                pl.BlockSpec((1, m_tile, n_tile * O * K), lambda b, m, n: (b, m, n)),   # kernel_basis
                pl.BlockSpec((O * K, O * C), lambda b, m, n: (0, 0)),                   # blockdiag Wk
                pl.BlockSpec((O * C, P * D), lambda b, m, n: (0, 0)),                   # scaled fiber kernel
                pl.BlockSpec((1, P * D), lambda b, m, n: (0, 0)),                       # bias
            ],
            out_specs=pl.BlockSpec((1, m_tile, P * D), lambda b, m, n: (b, m, 0)),
            scratch_shapes=[pltpu.VMEM((m_tile, O * C), f32)],                          # x1 accumulator
        ),
        compiler_params=pltpu.CompilerParams(
            dimension_semantics=("parallel", "parallel", "arbitrary"),
            vmem_limit_bytes=vmem_limit,
        ),
    )(x2d, kb3, wk_blk, fkt, bias_row)

    return out.reshape(B, M, P, D)


# ----------------------------------------------------------------------------------------------
# Plain-JAX reference (mask=None, non-depthwise) and self-test.
# ----------------------------------------------------------------------------------------------
def reference_forward(x, kernel_basis, fiber_kernel_basis, w_kernel, w_fiber, bias):
    C = w_kernel.shape[0]
    D = bias.shape[0]
    P, O, _ = fiber_kernel_basis.shape
    kernel = jnp.einsum('bmnok,ck->bmnoc', kernel_basis, w_kernel)
    fiber_kernel = jnp.einsum('pok,fk->pof', fiber_kernel_basis, w_fiber)
    x1 = jnp.einsum('bnoc,bmnoc->bmoc', x, kernel)
    fk = fiber_kernel.reshape(P, O, D, C)
    x2 = jnp.einsum('bmoc,podc->bmpd', x1, fk) / (C * D)
    return x2 + bias


if __name__ == "__main__":
    key = jax.random.PRNGKey(0)
    # small shapes consistent with the module's forward; n_tile=8 is forced so the
    # multi-n-tile accumulation path (init / += / epilogue) is exercised; m_tile auto-derives.
    B, M, N, O, P = 2, 8, 16, 4, 8
    C, D, KD = 4, 6, 8           # in_channels, out_channels, kernel_dim
    ks = jax.random.split(key, 5)

    x = jax.random.normal(ks[0], (B, N, O, C), jnp.float32)
    kernel_basis = jax.random.normal(ks[1], (B, M, N, O, KD), jnp.float32)
    fiber_kernel_basis = jax.random.normal(ks[2], (P, O, KD), jnp.float32)

    # deterministic parameter init matching nn.Linear / nn.Parameter shapes
    bound = 1.0 / (KD ** 0.5)
    w_kernel = jax.random.uniform(ks[3], (C, KD), jnp.float32, -bound, bound)        # kernel.weight
    w_fiber = jax.random.uniform(ks[4], (D * C, KD), jnp.float32, -bound, bound)     # fiber_kernel.weight
    bias = 0.1 * jnp.arange(D, dtype=jnp.float32)                                    # exercises the bias add

    out = separable_fiber_bundle_conv_fc(x, kernel_basis, fiber_kernel_basis,
                                         w_kernel, w_fiber, bias, n_tile=8)
    out = jax.block_until_ready(out)

    ref = reference_forward(x, kernel_basis, fiber_kernel_basis, w_kernel, w_fiber, bias)
    assert out.shape == (B, M, P, D)
    err = float(jnp.max(jnp.abs(out - ref)))
    assert jnp.allclose(out, ref, atol=1e-3, rtol=1e-3), err
    print("KERNEL_OK")
</pallas_src>

<mosaic_0001>
module attributes {stable_mosaic.version = 11 : i64} {
  func.func @_fused_kernel(%arg0: i32, %arg1: i32, %arg2: i32, %arg3: memref<1x8x16xf32, #tpu.memory_space<vmem>>, %arg4: memref<1x8x256xf32, #tpu.memory_space<vmem>>, %arg5: memref<32x16xf32, #tpu.memory_space<vmem>>, %arg6: memref<16x48xf32, #tpu.memory_space<vmem>>, %arg7: memref<1x48xf32, #tpu.memory_space<vmem>>, %arg8: memref<1x8x48xf32, #tpu.memory_space<vmem>>, %arg9: memref<8x16xf32, #tpu.memory_space<vmem>>) attributes {dimension_semantics = [#tpu.dimension_semantics<parallel>, #tpu.dimension_semantics<parallel>, #tpu.dimension_semantics<arbitrary>], iteration_bounds = array<i64: 2, 1, 2>, scalar_prefetch = 0 : i64, scratch_operands = 1 : i64, tpu.core_type = #tpu.core_type<tc>, window_params = [{transform_indices = @transform_0, window_bounds = array<i64: 1, 8, 16>}, {transform_indices = @transform_1, window_bounds = array<i64: 1, 8, 256>}, {pipeline_mode = #tpu.pipeline_mode<synchronous>, transform_indices = @transform_2, window_bounds = array<i64: 32, 16>}, {pipeline_mode = #tpu.pipeline_mode<synchronous>, transform_indices = @transform_3, window_bounds = array<i64: 16, 48>}, {pipeline_mode = #tpu.pipeline_mode<synchronous>, transform_indices = @transform_4, window_bounds = array<i64: 1, 48>}, {transform_indices = @transform_5, window_bounds = array<i64: 1, 8, 48>}]} {
    %c0 = arith.constant 0 : index
    %c0_0 = arith.constant 0 : index
    %0 = vector.load %arg5[%c0, %c0_0] : memref<32x16xf32, #tpu.memory_space<vmem>>, vector<32x16xf32>
    %1 = vector.shape_cast %0 : vector<32x16xf32> to vector<1x32x16xf32>
    %c0_1 = arith.constant 0 : index
    %c0_2 = arith.constant 0 : index
    %c0_3 = arith.constant 0 : index
    %2 = vector.load %arg3[%c0_1, %c0_2, %c0_3] : memref<1x8x16xf32, #tpu.memory_space<vmem>>, vector<1x8x16xf32>
    %3 = vector.shape_cast %2 : vector<1x8x16xf32> to vector<8x16xf32>
    %4 = vector.shape_cast %3 : vector<8x16xf32> to vector<8x1x16xf32>
    %5 = vector.broadcast %1 : vector<1x32x16xf32> to vector<8x32x16xf32>
    %6 = vector.broadcast %4 : vector<8x1x16xf32> to vector<8x32x16xf32>
    %7 = arith.mulf %5, %6 : vector<8x32x16xf32>
    %8 = vector.shape_cast %7 : vector<8x32x16xf32> to vector<256x16xf32>
    %c0_4 = arith.constant 0 : index
    %c0_5 = arith.constant 0 : index
    %c0_6 = arith.constant 0 : index
    %9 = vector.load %arg4[%c0_4, %c0_5, %c0_6] : memref<1x8x256xf32, #tpu.memory_space<vmem>>, vector<1x8x256xf32>
    %10 = vector.shape_cast %9 : vector<1x8x256xf32> to vector<8x256xf32>
    %cst = arith.constant dense<0.000000e+00> : vector<8x16xf32>
    %11 = tpu.matmul %10, %8, %cst {dimension_numbers = #tpu.dot_dimension_numbers<[1], [0], [0], [1], [0, 0, 1, 1], [], []>} : vector<8x256xf32>, vector<256x16xf32>, vector<8x16xf32> -> vector<8x16xf32>
    %c0_i32 = arith.constant 0 : i32
    %12 = arith.cmpi eq, %arg2, %c0_i32 : i32
    %13 = arith.extui %12 : i1 to i32
    %c0_i32_7 = arith.constant 0 : i32
    %14 = arith.cmpi ne, %13, %c0_i32_7 : i32
    scf.if %14 {
      %c0_11 = arith.constant 0 : index
      %c0_12 = arith.constant 0 : index
      %21 = vector.load %arg9[%c0_11, %c0_12] : memref<8x16xf32, #tpu.memory_space<vmem>>, vector<8x16xf32>
      tpu.vector_store %arg9[%c0_11, %c0_12], %11 {strides = array<i32>} : memref<8x16xf32, #tpu.memory_space<vmem>>, vector<8x16xf32>,
    } else {
    }
    %c0_i32_8 = arith.constant 0 : i32
    %15 = arith.cmpi sgt, %arg2, %c0_i32_8 : i32
    %16 = arith.extui %15 : i1 to i32
    %c0_i32_9 = arith.constant 0 : i32
    %17 = arith.cmpi ne, %16, %c0_i32_9 : i32
    scf.if %17 {
      %c0_11 = arith.constant 0 : index
      %c0_12 = arith.constant 0 : index
      %21 = vector.load %arg9[%c0_11, %c0_12] : memref<8x16xf32, #tpu.memory_space<vmem>>, vector<8x16xf32>
      %22 = arith.addf %21, %11 : vector<8x16xf32>
      %c0_13 = arith.constant 0 : index
      %c0_14 = arith.constant 0 : index
      %23 = vector.load %arg9[%c0_13, %c0_14] : memref<8x16xf32, #tpu.memory_space<vmem>>, vector<8x16xf32>
      tpu.vector_store %arg9[%c0_13, %c0_14], %22 {strides = array<i32>} : memref<8x16xf32, #tpu.memory_space<vmem>>, vector<8x16xf32>,
    } else {
    }
    %c1_i32 = arith.constant 1 : i32
    %18 = arith.cmpi eq, %arg2, %c1_i32 : i32
    %19 = arith.extui %18 : i1 to i32
    %c0_i32_10 = arith.constant 0 : i32
    %20 = arith.cmpi ne, %19, %c0_i32_10 : i32
    scf.if %20 {
      %c0_11 = arith.constant 0 : index
      %c0_12 = arith.constant 0 : index
      %21 = vector.load %arg9[%c0_11, %c0_12] : memref<8x16xf32, #tpu.memory_space<vmem>>, vector<8x16xf32>
      %c0_13 = arith.constant 0 : index
      %c0_14 = arith.constant 0 : index
      %22 = vector.load %arg6[%c0_13, %c0_14] : memref<16x48xf32, #tpu.memory_space<vmem>>, vector<16x48xf32>
      %cst_15 = arith.constant dense<0.000000e+00> : vector<8x48xf32>
      %23 = tpu.matmul %21, %22, %cst_15 {dimension_numbers = #tpu.dot_dimension_numbers<[1], [0], [0], [1], [0, 0, 1, 1], [], []>} : vector<8x16xf32>, vector<16x48xf32>, vector<8x48xf32> -> vector<8x48xf32>
      %c0_16 = arith.constant 0 : index
      %c0_17 = arith.constant 0 : index
      %24 = vector.load %arg7[%c0_16, %c0_17] : memref<1x48xf32, #tpu.memory_space<vmem>>, vector<1x48xf32>
      %25 = vector.broadcast %24 : vector<1x48xf32> to vector<8x48xf32>
      %26 = arith.addf %23, %25 : vector<8x48xf32>
      %c0_18 = arith.constant 0 : index
      %c0_19 = arith.constant 0 : index
      %c0_20 = arith.constant 0 : index
      %27 = vector.load %arg8[%c0_18, %c0_19, %c0_20] : memref<1x8x48xf32, #tpu.memory_space<vmem>>, vector<1x8x48xf32>
      %28 = vector.shape_cast %27 : vector<1x8x48xf32> to vector<8x48xf32>
      %29 = vector.shape_cast %26 : vector<8x48xf32> to vector<1x8x48xf32>
      tpu.vector_store %arg8[%c0_18, %c0_19, %c0_20], %29 {strides = array<i32>} : memref<1x8x48xf32, #tpu.memory_space<vmem>>, vector<1x8x48xf32>,
    } else {
    }
    return
  }
  func.func @transform_0(%arg0: i32, %arg1: i32, %arg2: i32) -> (i32, i32, i32) {
    %c0_i32 = arith.constant 0 : i32
    %c0_i32_0 = arith.constant 0 : i32
    return %arg0, %arg2, %c0_i32 : i32, i32, i32
  }
  func.func @transform_1(%arg0: i32, %arg1: i32, %arg2: i32) -> (i32, i32, i32) {
    %c0_i32 = arith.constant 0 : i32
    return %arg0, %arg1, %arg2 : i32, i32, i32
  }
  func.func @transform_2(%arg0: i32, %arg1: i32, %arg2: i32) -> (i32, i32) {
    %c0_i32 = arith.constant 0 : i32
    %c0_i32_0 = arith.constant 0 : i32
    %c0_i32_1 = arith.constant 0 : i32
    return %c0_i32, %c0_i32_0 : i32, i32
  }
  func.func @transform_3(%arg0: i32, %arg1: i32, %arg2: i32) -> (i32, i32) {
    %c0_i32 = arith.constant 0 : i32
    %c0_i32_0 = arith.constant 0 : i32
    %c0_i32_1 = arith.constant 0 : i32
    return %c0_i32, %c0_i32_0 : i32, i32
  }
  func.func @transform_4(%arg0: i32, %arg1: i32, %arg2: i32) -> (i32, i32) {
    %c0_i32 = arith.constant 0 : i32
    %c0_i32_0 = arith.constant 0 : i32
    %c0_i32_1 = arith.constant 0 : i32
    return %c0_i32, %c0_i32_0 : i32, i32
  }
  func.func @transform_5(%arg0: i32, %arg1: i32, %arg2: i32) -> (i32, i32, i32) {
    %c0_i32 = arith.constant 0 : i32
    %c0_i32_0 = arith.constant 0 : i32
    return %arg0, %arg1, %c0_i32 : i32, i32, i32
  }
}

</mosaic_0001>

<llo_original>
// kernel: tpu_custom_call.1
$region0: #{tpu_custom_call.1}
  #allocation0 [shape = 'u32[]', space=smem, size = 0x4, offset = 0x4, fixed_abs, tag = 'smem constant byte address 0x4 - core index']
  #allocation1 [shape = 'u32[144,128]{1,0:T(1,128)}', space=vmem, size = 0x12000, scoped, tag = 'internal scratch']
  #allocation2 [shape = 'f32[8,16]{1,0:T(8,128)}', space=vmem, size = 0x1000, scoped, tag = 'scratch operand']
  %s0 = inlined_call_operand.vmem [shape: f32[2,16,16], index: 0, kind: input, shape index: {}]
  %s1 = inlined_call_operand.hbm [shape: f32[2,8,512], index: 1, kind: input, shape index: {}]
  %s2 = inlined_call_operand.vmem [shape: f32[32,16], index: 2, kind: input, shape index: {}]
  %s3 = inlined_call_operand.vmem [shape: f32[16,48], index: 3, kind: input, shape index: {}]
  %s4 = inlined_call_operand.vmem [shape: f32[1,48], index: 4, kind: input, shape index: {}]
  %s5 = inlined_call_operand.hbm [shape: f32[2,8,48], index: 5, kind: output, shape index: {}]
  %s6 = sld [smem:[#allocation0]]
  $region69: #{tpu_custom_call.1} parent=0
    _
  %s8 = ssub.s32 1, %s6
  %s9 = scalar_select 0, %s8, %s6
  $region1: #{tpu_custom_call.1} parent=0
    #allocation3 [shape = 'u8[16384]{0}', space=vmem, size = 0x4000, scoped, tag = 'input window, operand 1']
    #allocation4 [shape = 's32[2]{0}', space=sflag, size = 0x8, scoped, tag = 'scoped memory for tpu_custom_call.1']
    #allocation5 [shape = 's32[2]{0}', space=sflag, size = 0x8, scoped, tag = 'scoped memory for tpu_custom_call.1']
    #allocation6 [shape = 'u8[8192]{0}', space=vmem, size = 0x2000, scoped, tag = 'output window, operand 0']
    %10 = vsyncpa [#allocation4], 0
    %s11 = scalar_lea.sflag [#allocation4], 1
    %12 = vsyncpa %s11, 0
    %13 = vsyncpa [#allocation5], 0
    %s14 = scalar_lea.sflag [#allocation5], 1
    %15 = vsyncpa %s14, 0
    loop: start=0, step=1, limit=6
    $region2: #{tpu_custom_call.1} parent=1 // loop_pre_header
      _
    $region3: #{tpu_custom_call.1} parent=1 // loop_header
      %s17 = sphi 0, %s21
      %p18 = scmp.ge.s32.totalorder %s17, 6
      %s24 = sphi 0, %s43
      %s25 = sphi 0, %s39
      %s26 = sphi 0, %s35
      %s27 = sphi 0, %s24
      %s28 = sphi 0, %s25
      %s29 = sphi 0, %s26
      %s30 = sphi 0, %s27
      %s31 = sphi 0, %s28
      %s32 = sphi 0, %s29
      %s48 = sphi 0, %s50
      %s51 = sphi 0, %s48
      %s52 = sphi 0, %s51
      %s68 = sphi 0, %s52
      %s78 = sphi 0, %s80
      %s81 = sphi 0, %s78
      %s82 = sphi 0, %s81
      %s98 = sphi 0, %s82
      %s102 = sphi 0, %s102
      %s104 = sphi 0, %s102
      %s105 = sphi 0, %s104
      %s119 = sphi 0, %s105
      %s123 = sphi 0, %s123
      %s125 = sphi 0, %s123
      %s126 = sphi 0, %s125
      %s140 = sphi 0, %s126
      %s144 = sphi 0, %s144
      %s146 = sphi 0, %s144
      %s147 = sphi 0, %s146
      %s161 = sphi 0, %s147
      %s169 = sphi 0, %s171
      %s172 = sphi 0, %s169
      %s173 = sphi 0, %s172
      %s189 = sphi 0, %s173
    $region4: #{tpu_custom_call.1} parent=1 // loop_header_branch
      %20 = sbr.rel (%p18) target = $region8
    $region5: #{tpu_custom_call.1} parent=1 // loop_body
      %s22 = ssub.s32 %s17, 1
      %s23 = ssub.s32 %s17, 2
      %s33 = sadd.s32 1, %s26
      %p34 = scmp.ge.s32.totalorder %s33, 2
      %s35 = scalar_select %p34, 0, %s33
      %s36 = sadd.s32 1, %s25
      %s37 = scalar_select %p34, %s36, %s25
      %p38 = scmp.ge.s32.totalorder %s37, 1
      %s39 = scalar_select %p38, 0, %s37
      %s40 = sadd.s32 1, %s24
      %s41 = scalar_select %p38, %s40, %s24
      %p42 = scmp.ge.s32.totalorder %s41, 2
      %s43 = scalar_select %p42, 0, %s41
      %s44 = ssub.s32 %s24, %s43
      %s45 = ssub.s32 %s26, %s35
      %s46 = sor.u32 %s44, %s45
      %p47 = scmp.eq.s32.totalorder %s46, 0
      %s49 = sadd.s32 %s48, 1
      %s50 = scalar_select %p47, %s48, %s49
      %p53 = pneg %p47
      %p54 = scmp.eq.s32.totalorder %s17, 3
      %p55 = por %p53, %p54
      %p56 = scmp.ne.s32.totalorder %s48, %s51
      %p57 = scmp.eq.s32.totalorder %s17, 0
      %p58 = por %p56, %p57
      %p59 = scmp.ne.s32.totalorder %s48, %s51
      %p60 = scmp.eq.s32.totalorder %s22, 3
      %p61 = por %p59, %p60
      %p62 = scmp.ne.s32.totalorder %s51, %s52
      %p63 = scmp.eq.s32.totalorder %s22, 0
      %p64 = por %p62, %p63
      %p65 = scmp.ne.s32.totalorder %s51, %s52
      %p66 = scmp.eq.s32.totalorder %s23, 3
      %p67 = por %p65, %p66
      %p69 = scmp.ne.s32.totalorder %s52, %s68
      %p70 = scmp.eq.s32.totalorder %s23, 0
      %p71 = por %p69, %p70
      %s72 = ssub.s32 %s24, %s43
      %s73 = ssub.s32 %s25, %s39
      %s74 = sor.u32 %s72, %s73
      %s75 = ssub.s32 %s26, %s35
      %s76 = sor.u32 %s74, %s75
      %p77 = scmp.eq.s32.totalorder %s76, 0
      %s79 = sadd.s32 %s78, 1
      %s80 = scalar_select %p77, %s78, %s79
      %p83 = pneg %p77
      %p84 = scmp.eq.s32.totalorder %s17, 3
      %p85 = por %p83, %p84
      %p86 = scmp.ne.s32.totalorder %s78, %s81
      %p87 = scmp.eq.s32.totalorder %s17, 0
      %p88 = por %p86, %p87
      %p89 = scmp.ne.s32.totalorder %s78, %s81
      %p90 = scmp.eq.s32.totalorder %s22, 3
      %p91 = por %p89, %p90
      %p92 = scmp.ne.s32.totalorder %s81, %s82
      %p93 = scmp.eq.s32.totalorder %s22, 0
      %p94 = por %p92, %p93
      %p95 = scmp.ne.s32.totalorder %s81, %s82
      %p96 = scmp.eq.s32.totalorder %s23, 3
      %p97 = por %p95, %p96
      %p99 = scmp.ne.s32.totalorder %s82, %s98
      %p100 = scmp.eq.s32.totalorder %s23, 0
      %p101 = por %p99, %p100
      %s103 = sadd.s32 %s102, 1
      %p106 = scmp.eq.s32.totalorder %s17, 3
      %p107 = scmp.ne.s32.totalorder %s102, %s104
      %p108 = scmp.eq.s32.totalorder %s17, 0
      %p109 = por %p107, %p108
      %p110 = scmp.ne.s32.totalorder %s102, %s104
      %p111 = scmp.eq.s32.totalorder %s22, 3
      %p112 = por %p110, %p111
      %p113 = scmp.ne.s32.totalorder %s104, %s105
      %p114 = scmp.eq.s32.totalorder %s22, 0
      %p115 = por %p113, %p114
      %p116 = scmp.ne.s32.totalorder %s104, %s105
      %p117 = scmp.eq.s32.totalorder %s23, 3
      %p118 = por %p116, %p117
      %p120 = scmp.ne.s32.totalorder %s105, %s119
      %p121 = scmp.eq.s32.totalorder %s23, 0
      %p122 = por %p120, %p121
      %s124 = sadd.s32 %s123, 1
      %p127 = scmp.eq.s32.totalorder %s17, 3
      %p128 = scmp.ne.s32.totalorder %s123, %s125
      %p129 = scmp.eq.s32.totalorder %s17, 0
      %p130 = por %p128, %p129
      %p131 = scmp.ne.s32.totalorder %s123, %s125
      %p132 = scmp.eq.s32.totalorder %s22, 3
      %p133 = por %p131, %p132
      %p134 = scmp.ne.s32.totalorder %s125, %s126
      %p135 = scmp.eq.s32.totalorder %s22, 0
      %p136 = por %p134, %p135
      %p137 = scmp.ne.s32.totalorder %s125, %s126
      %p138 = scmp.eq.s32.totalorder %s23, 3
      %p139 = por %p137, %p138
      %p141 = scmp.ne.s32.totalorder %s126, %s140
      %p142 = scmp.eq.s32.totalorder %s23, 0
      %p143 = por %p141, %p142
      %s145 = sadd.s32 %s144, 1
      %p148 = scmp.eq.s32.totalorder %s17, 3
      %p149 = scmp.ne.s32.totalorder %s144, %s146
      %p150 = scmp.eq.s32.totalorder %s17, 0
      %p151 = por %p149, %p150
      %p152 = scmp.ne.s32.totalorder %s144, %s146
      %p153 = scmp.eq.s32.totalorder %s22, 3
      %p154 = por %p152, %p153
      %p155 = scmp.ne.s32.totalorder %s146, %s147
      %p156 = scmp.eq.s32.totalorder %s22, 0
      %p157 = por %p155, %p156
      %p158 = scmp.ne.s32.totalorder %s146, %s147
      %p159 = scmp.eq.s32.totalorder %s23, 3
      %p160 = por %p158, %p159
      %p162 = scmp.ne.s32.totalorder %s147, %s161
      %p163 = scmp.eq.s32.totalorder %s23, 0
      %p164 = por %p162, %p163
      %s165 = ssub.s32 %s24, %s43
      %s166 = ssub.s32 %s25, %s39
      %s167 = sor.u32 %s165, %s166
      %p168 = scmp.eq.s32.totalorder %s167, 0
      %s170 = sadd.s32 %s169, 1
      %s171 = scalar_select %p168, %s169, %s170
      %p174 = pneg %p168
      %p175 = scmp.eq.s32.totalorder %s17, 3
      %p176 = por %p174, %p175
      %p177 = scmp.ne.s32.totalorder %s169, %s172
      %p178 = scmp.eq.s32.totalorder %s17, 0
      %p179 = por %p177, %p178
      %p180 = scmp.ne.s32.totalorder %s169, %s172
      %p181 = scmp.eq.s32.totalorder %s22, 3
      %p182 = por %p180, %p181
      %p183 = scmp.ne.s32.totalorder %s172, %s173
      %p184 = scmp.eq.s32.totalorder %s22, 0
      %p185 = por %p183, %p184
      %p186 = scmp.ne.s32.totalorder %s172, %s173
      %p187 = scmp.eq.s32.totalorder %s23, 3
      %p188 = por %p186, %p187
      %p190 = scmp.ne.s32.totalorder %s173, %s189
      %p191 = scmp.eq.s32.totalorder %s23, 0
      %p192 = por %p190, %p191
      %p193 = scmp.le.s32.totalorder 1, %s17
      %p194 = scmp.lt.s32.totalorder %s17, 5
      %p195 = pnand %p193, %p194
      %p196 = pneg %p195
      // Predicated region
      $region9: #{tpu_custom_call.1} parent=5 // pred_check
        _
      $region10: #{tpu_custom_call.1} parent=5 // pred_check_branch
        %198 = sbr.rel (%p195) target = $region12
      $region11: #{tpu_custom_call.1} parent=5 // pred_region
        %s199 = ssub.s32 %s17, 1
        // Predicated region
        $region13: #{tpu_custom_call.1} parent=11 // pred_check
          %p200 = pneg %p115
        $region14: #{tpu_custom_call.1} parent=11 // pred_check_branch
          %202 = sbr.rel (%p200) target = $region16
        $region15: #{tpu_custom_call.1} parent=11 // pred_region
          _
        $region16: #{tpu_custom_call.1} parent=11 // pred_fallthru
          _
        // Predicated region
        $region17: #{tpu_custom_call.1} parent=11 // pred_check
          %p203 = pneg %p136
        $region18: #{tpu_custom_call.1} parent=11 // pred_check_branch
          %205 = sbr.rel (%p203) target = $region20
        $region19: #{tpu_custom_call.1} parent=11 // pred_region
          _
        $region20: #{tpu_custom_call.1} parent=11 // pred_fallthru
          _
        // Predicated region
        $region21: #{tpu_custom_call.1} parent=11 // pred_check
          %p206 = pneg %p157
        $region22: #{tpu_custom_call.1} parent=11 // pred_check_branch
          %208 = sbr.rel (%p206) target = $region24
        $region23: #{tpu_custom_call.1} parent=11 // pred_region
          _
        $region24: #{tpu_custom_call.1} parent=11 // pred_fallthru
          _
      $region12: #{tpu_custom_call.1} parent=5 // pred_fallthru
        _
      %p209 = scmp.lt.s32.totalorder %s17, 4
      // Predicated region
      $region25: #{tpu_custom_call.1} parent=5 // pred_check
        %p210 = pneg %p209
      $region26: #{tpu_custom_call.1} parent=5 // pred_check_branch
        %212 = sbr.rel (%p210) target = $region28
      $region27: #{tpu_custom_call.1} parent=5 // pred_region
        // Predicated region
        $region29: #{tpu_custom_call.1} parent=27 // pred_check
          %p213 = pneg %p58
        $region30: #{tpu_custom_call.1} parent=27 // pred_check_branch
          %215 = sbr.rel (%p213) target = $region32
        $region31: #{tpu_custom_call.1} parent=27 // pred_region
          %p216 = scmp.lt.s32.totalorder %s24, 1
          %s217 = scalar_select %p216, %s24, 1
          %p218 = scmp.lt.s32.totalorder %s26, 1
          %s219 = scalar_select %p218, %s26, 1
          %s220 = smul.addr %s217, 2
          %s221 = sadd.s32 %s219, %s220
          %s222 = smul.addr %s221, 8
          %s223 = scalar_lea.vmem %s0, %s222
        $region32: #{tpu_custom_call.1} parent=27 // pred_fallthru
          _
        // Predicated region
        $region33: #{tpu_custom_call.1} parent=27 // pred_check
          %p224 = pneg %p88
        $region34: #{tpu_custom_call.1} parent=27 // pred_check_branch
          %226 = sbr.rel (%p224) target = $region36
        $region35: #{tpu_custom_call.1} parent=27 // pred_region
          %s227 = sand.u32 %s78, 1
          %s228 = scalar_lea.sflag [#allocation4], %s227
          %s229 = sand.u32 %s78, 1
          %s230 = smul.addr %s229, 16
          %s231 = scalar_lea.vmem [#allocation3], %s230
          %s232 = smul.u32 2, %s26
          %s234 = ssub.s32 256, 256
          %235 = vsyncadd %s228, %s234
          %s236 = smul.addr %s25, 4
          %s237 = sadd.s32 %s232, %s236
          %s238 = smul.addr %s24, 4
          %s239 = sadd.s32 %s237, %s238
          %s240 = smul.addr %s239, 128
          %s241 = scalar_lea.hbm %s1, %s240
          %s243 = sshll.u32 %s231, 4
          %s244 = int_to_ptr.vmem [resolvable:$true] %s243
          %246 = dma.hbm_to_vmem [thread:$0]  %s241, 256, %s244, %s228
        $region36: #{tpu_custom_call.1} parent=27 // pred_fallthru
          _
      $region28: #{tpu_custom_call.1} parent=5 // pred_fallthru
        _
      %p247 = scmp.le.s32.totalorder 1, %s17
      %p248 = scmp.lt.s32.totalorder %s17, 5
      %p249 = pnand %p247, %p248
      %p250 = pneg %p249
      // Predicated region
      $region37: #{tpu_custom_call.1} parent=5 // pred_check
        _
      $region38: #{tpu_custom_call.1} parent=5 // pred_check_branch
        %252 = sbr.rel (%p249) target = $region40
      $region39: #{tpu_custom_call.1} parent=5 // pred_region
        %s253 = ssub.s32 %s17, 1
        %s254 = sand.u32 %s81, 1
        %s255 = scalar_lea.sflag [#allocation4], %s254
        %s256 = sand.u32 %s81, 1
        %s257 = smul.addr %s256, 16
        %s258 = scalar_lea.vmem [#allocation3], %s257
        // Predicated region
        $region41: #{tpu_custom_call.1} parent=39 // pred_check
          %p259 = pneg %p94
        $region42: #{tpu_custom_call.1} parent=39 // pred_check_branch
          %261 = sbr.rel (%p259) target = $region44
        $region43: #{tpu_custom_call.1} parent=39 // pred_region
          %262 = dma.done %s255, 256
        $region44: #{tpu_custom_call.1} parent=39 // pred_fallthru
          _
        %p263 = scmp.lt.s32.totalorder %s27, 1
        %s264 = scalar_select %p263, %s27, 1
        %p265 = scmp.lt.s32.totalorder %s29, 1
        %s266 = scalar_select %p265, %s29, 1
        %s267 = smul.addr %s264, 2
        %s268 = sadd.s32 %s266, %s267
        %s269 = smul.addr %s268, 8
        %s270 = scalar_lea.vmem %s0, %s269
        %p271 = pneg %p64
        %p272 = pneg %p61
        %s273 = sand.u32 %s81, 1
        %s274 = scalar_lea.sflag [#allocation4], %s273
        %s275 = sand.u32 %s81, 1
        %s276 = smul.addr %s275, 16
        %s277 = scalar_lea.vmem [#allocation3], %s276
        %p278 = pneg %p94
        %p279 = pneg %p91
        %p280 = pneg %p115
        %p281 = pneg %p112
        %p282 = pneg %p136
        %p283 = pneg %p133
        %p284 = pneg %p157
        %p285 = pneg %p154
        %p286 = pneg %p185
        %p287 = pneg %p182
        %s288 = sand.u32 %s172, 1
        %s289 = scalar_lea.sflag [#allocation5], %s288
        %s290 = sand.u32 %s172, 1
        %s291 = smul.addr %s290, 8
        %s292 = scalar_lea.vmem [#allocation6], %s291
        %p293 = scmp.lt.s32.totalorder %s27, 1
        %s294 = scalar_select %p293, %s27, 1
        %p295 = scmp.lt.s32.totalorder %s29, 1
        %s296 = scalar_select %p295, %s29, 1
        %s297 = smul.addr %s294, 2
        %s298 = sadd.s32 %s296, %s297
        %s299 = smul.addr %s298, 8
        %s300 = scalar_lea.vmem %s0, %s299
        %s301 = smul.u32 2, %s29
        %v302 = vld [vmem:[%s2] sm:$0xff]
        %v303 = vld [vmem:[%s2 + $0x8] sm:$0xff]
        %v304 = vld [vmem:[%s2 + $0x10] sm:$0xff]
        %v305 = vld [vmem:[%s2 + $0x18] sm:$0xff]
        %v306 = vld [vmem:[%s300] sm:$0xff]
        %v308 = vcombine.high %v306, %v306
        %v310 = vunpack.c.l.s4 1966171168
        %v311 = vunpack.c.0.s8 %v310
        %v312 = vlaneseq
        %v313 = vshrl.u32 %v312, 7
        %v314 = vsub.s32 %v311, %v313
        %v315 = vrot.slane %v306, %v314
        %v317 = vunpack.c.l.s4 1966171168
        %v318 = vunpack.c.0.s8 %v317
        %v319 = vlaneseq
        %v320 = vshrl.u32 %v319, 7
        %v321 = vsub.s32 %v318, %v320
        %v322 = vrot.slane %v308, %v321
        %v323 = vcombine.high %v315, %v315
        %v324 = vcombine.high %v322, %v322
        %v326 = vunpack.c.l.s4 1966171168
        %v327 = vunpack.c.0.s8 %v326
        %v328 = vlaneseq
        %v329 = vshrl.u32 %v328, 7
        %v330 = vsub.s32 %v327, %v329
        %v331 = vrot.slane %v315, %v330
        %v333 = vunpack.c.l.s4 1966171168
        %v334 = vunpack.c.0.s8 %v333
        %v335 = vlaneseq
        %v336 = vshrl.u32 %v335, 7
        %v337 = vsub.s32 %v334, %v336
        %v338 = vrot.slane %v322, %v337
        %v340 = vunpack.c.l.s4 1966171168
        %v341 = vunpack.c.0.s8 %v340
        %v342 = vlaneseq
        %v343 = vshrl.u32 %v342, 7
        %v344 = vsub.s32 %v341, %v343
        %v345 = vrot.slane %v323, %v344
        %v347 = vunpack.c.l.s4 1966171168
        %v348 = vunpack.c.0.s8 %v347
        %v349 = vlaneseq
        %v350 = vshrl.u32 %v349, 7
        %v351 = vsub.s32 %v348, %v350
        %v352 = vrot.slane %v324, %v351
        %v353 = vcombine.high %v331, %v331
        %v354 = vcombine.high %v338, %v338
        %v355 = vcombine.high %v345, %v345
        %v356 = vcombine.high %v352, %v352
        %v357 = vlaneseq
        %v358 = vshrl.u32 %v357, 7
        %v359 = vsub.s32 0, %v358
        %v360 = vrot.slane %v331, %v359
        %v361 = vlaneseq
        %v362 = vshrl.u32 %v361, 7
        %v363 = vsub.s32 0, %v362
        %v364 = vrot.slane %v345, %v363
        %v365 = vlaneseq
        %v366 = vshrl.u32 %v365, 7
        %v367 = vsub.s32 0, %v366
        %v368 = vrot.slane %v353, %v367
        %v369 = vlaneseq
        %v370 = vshrl.u32 %v369, 7
        %v371 = vsub.s32 0, %v370
        %v372 = vrot.slane %v355, %v371
        %v373 = vlaneseq
        %v374 = vshrl.u32 %v373, 7
        %v375 = vsub.s32 0, %v374
        %v376 = vrot.slane %v338, %v375
        %v377 = vlaneseq
        %v378 = vshrl.u32 %v377, 7
        %v379 = vsub.s32 0, %v378
        %v380 = vrot.slane %v352, %v379
        %v381 = vlaneseq
        %v382 = vshrl.u32 %v381, 7
        %v383 = vsub.s32 0, %v382
        %v384 = vrot.slane %v354, %v383
        %v385 = vlaneseq
        %v386 = vshrl.u32 %v385, 7
        %v387 = vsub.s32 0, %v386
        %v388 = vrot.slane %v356, %v387
        %v397 = vmul.f32 %v302, %v360
        %v398 = vmul.f32 %v303, %v360
        %v399 = vmul.f32 %v304, %v360
        %v400 = vmul.f32 %v305, %v360
        %v401 = vmul.f32 %v302, %v364
        %v402 = vmul.f32 %v303, %v364
        %v403 = vmul.f32 %v304, %v364
        %v404 = vmul.f32 %v305, %v364
        %v405 = vmul.f32 %v302, %v368
        %v406 = vmul.f32 %v303, %v368
        %v407 = vmul.f32 %v304, %v368
        %v408 = vmul.f32 %v305, %v368
        %v409 = vmul.f32 %v302, %v372
        %v410 = vmul.f32 %v303, %v372
        %v411 = vmul.f32 %v304, %v372
        %v412 = vmul.f32 %v305, %v372
        %v413 = vmul.f32 %v302, %v376
        %v414 = vmul.f32 %v303, %v376
        %v415 = vmul.f32 %v304, %v376
        %v416 = vmul.f32 %v305, %v376
        %v417 = vmul.f32 %v302, %v380
        %v418 = vmul.f32 %v303, %v380
        %v419 = vmul.f32 %v304, %v380
        %v420 = vmul.f32 %v305, %v380
        %v421 = vmul.f32 %v302, %v384
        %v422 = vmul.f32 %v303, %v384
        %v423 = vmul.f32 %v304, %v384
        %v424 = vmul.f32 %v305, %v384
        %v425 = vmul.f32 %v302, %v388
        %v426 = vmul.f32 %v303, %v388
        %v427 = vmul.f32 %v304, %v388
        %v428 = vmul.f32 %v305, %v388
        %v429 = vld [vmem:[%s258] sm:$0xff]
        %v430 = vld [vmem:[%s258 + $0x8] sm:$0xff]
        %431 = vmatprep.subr.mxu0 0.0
        %432 = vmatpush1.msra.mxu0 %v412
        %433 = vmatprep.subr.mxu0 0.0
        %434 = vmatpush1.msra.mxu0 %v411
        %435 = vmatprep.subr.mxu0 0.0
        %436 = vmatpush1.msra.mxu0 %v410
        %437 = vmatprep.subr.mxu0 0.0
        %438 = vmatpush1.msra.mxu0 %v409
        %439 = vmatprep.subr.mxu0 0.0
        %440 = vmatpush1.msra.mxu0 %v408
        %441 = vmatprep.subr.mxu0 0.0
        %442 = vmatpush1.msra.mxu0 %v407
        %443 = vmatprep.subr.mxu0 0.0
        %444 = vmatpush1.msra.mxu0 %v406
        %445 = vmatprep.subr.mxu0 0.0
        %446 = vmatpush1.msra.mxu0 %v405
        %447 = vmatprep.subr.mxu0 0.0
        %448 = vmatpush1.msra.mxu0 %v404
        %449 = vmatprep.subr.mxu0 0.0
        %450 = vmatpush1.msra.mxu0 %v403
        %451 = vmatprep.subr.mxu0 0.0
        %452 = vmatpush1.msra.mxu0 %v402
        %453 = vmatprep.subr.mxu0 0.0
        %454 = vmatpush1.msra.mxu0 %v401
        %455 = vmatprep.subr.mxu0 0.0
        %456 = vmatpush1.msra.mxu0 %v400
        %457 = vmatprep.subr.mxu0 0.0
        %458 = vmatpush1.msra.mxu0 %v399
        %459 = vmatprep.subr.mxu0 0.0
        %460 = vmatpush1.msra.mxu0 %v398
        %461 = vmatprep.subr.mxu0 0.0
        %462 = vmatpush1.msra.mxu0 %v397
        %463 = vmatprep.subr.mxu0 0.0
        %464 = vmatpush2.msra.mxu0 %v428
        %465 = vmatprep.subr.mxu0 0.0
        %466 = vmatpush2.msra.mxu0 %v427
        %467 = vmatprep.subr.mxu0 0.0
        %468 = vmatpush2.msra.mxu0 %v426
        %469 = vmatprep.subr.mxu0 0.0
        %470 = vmatpush2.msra.mxu0 %v425
        %471 = vmatprep.subr.mxu0 0.0
        %472 = vmatpush2.msra.mxu0 %v424
        %473 = vmatprep.subr.mxu0 0.0
        %474 = vmatpush2.msra.mxu0 %v423
        %475 = vmatprep.subr.mxu0 0.0
        %476 = vmatpush2.msra.mxu0 %v422
        %477 = vmatprep.subr.mxu0 0.0
        %478 = vmatpush2.msra.mxu0 %v421
        %479 = vmatprep.subr.mxu0 0.0
        %480 = vmatpush2.msra.mxu0 %v420
        %481 = vmatprep.subr.mxu0 0.0
        %482 = vmatpush2.msra.mxu0 %v419
        %483 = vmatprep.subr.mxu0 0.0
        %484 = vmatpush2.msra.mxu0 %v418
        %485 = vmatprep.subr.mxu0 0.0
        %486 = vmatpush2.msra.mxu0 %v417
        %487 = vmatprep.subr.mxu0 0.0
        %488 = vmatpush2.msra.mxu0 %v416
        %489 = vmatprep.subr.mxu0 0.0
        %490 = vmatpush2.msra.mxu0 %v415
        %491 = vmatprep.subr.mxu0 0.0
        %492 = vmatpush2.msra.mxu0 %v414
        %493 = vmatprep.subr.mxu0 0.0
        %494 = vmatpush2.msra.mxu0 %v413
        %495 = vmatprep.mubr.f32.mxu0 %v430
        %496 = vmatmul.mubr.f32.gmra.mxu0 %v429
        %v497 = vpop.f32.mrf.mxu0
        %v498 = vadd.f32 0.0, %v497
        %v499 = vpop.f32.mrf.mxu0
        %500 = vdwg.mxu0
        %p501 = scmp.eq.s32.totalorder %s29, 0
        // Predicated region
        $region45: #{tpu_custom_call.1} parent=39 // pred_check
          %p502 = pneg %p501
        $region46: #{tpu_custom_call.1} parent=39 // pred_check_branch
          %504 = sbr.rel (%p502) target = $region48
        $region47: #{tpu_custom_call.1} parent=39 // pred_region
          %vm505 = vcmask 130048
          %506 = vst.msk [vmem:[#allocation2] sm:$0xff] %vm505, %v498
        $region48: #{tpu_custom_call.1} parent=39 // pred_fallthru
          _
        %p507 = scmp.gt.s32.totalorder %s29, 0
        // Predicated region
        $region49: #{tpu_custom_call.1} parent=39 // pred_check
          %p508 = pneg %p507
        $region50: #{tpu_custom_call.1} parent=39 // pred_check_branch
          %510 = sbr.rel (%p508) target = $region52
        $region51: #{tpu_custom_call.1} parent=39 // pred_region
          %v511 = vld [vmem:[#allocation2] sm:$0xff]
          %v512 = vadd.f32 %v511, %v498
          %vm513 = vcmask 130048
          %514 = vst.msk [vmem:[#allocation2] sm:$0xff] %vm513, %v512
        $region52: #{tpu_custom_call.1} parent=39 // pred_fallthru
          _
        %p515 = scmp.eq.s32.totalorder %s29, 1
        // Predicated region
        $region53: #{tpu_custom_call.1} parent=39 // pred_check
          %p516 = pneg %p515
        $region54: #{tpu_custom_call.1} parent=39 // pred_check_branch
          %518 = sbr.rel (%p516) target = $region56
        $region55: #{tpu_custom_call.1} parent=39 // pred_region
          %v519 = vld [vmem:[#allocation2] sm:$0xff]
          %v520 = vld [vmem:[%s3] sm:$0xff]
          %v521 = vld [vmem:[%s3 + $0x8] sm:$0xff]
          %v522 = vld [vmem:[%s4] sm:$0x1]
          %v524 = vlaneseq
          %v525 = vshrl.u32 %v524, 7
          %v526 = vsub.s32 0, %v525
          %v527 = vrot.slane %v522, %v526
          %vm529 = vcmask 130048
          %v531 = vsel %vm529, %v519, 0
          %533 = vmatprep.subr.mxu0 0.0
          %534 = vmatpush1.msra.mxu0 0.0
          %535 = vmatprep.subr.mxu0 0.0
          %536 = vmatpush1.msra.mxu0 0.0
          %537 = vmatprep.subr.mxu0 0.0
          %538 = vmatpush1.msra.mxu0 0.0
          %539 = vmatprep.subr.mxu0 0.0
          %540 = vmatpush1.msra.mxu0 0.0
          %541 = vmatprep.subr.mxu0 0.0
          %542 = vmatpush1.msra.mxu0 0.0
          %543 = vmatprep.subr.mxu0 0.0
          %544 = vmatpush1.msra.mxu0 0.0
          %545 = vmatprep.subr.mxu0 0.0
          %546 = vmatpush1.msra.mxu0 0.0
          %547 = vmatprep.subr.mxu0 0.0
          %548 = vmatpush1.msra.mxu0 0.0
          %549 = vmatprep.subr.mxu0 0.0
          %550 = vmatpush1.msra.mxu0 0.0
          %551 = vmatprep.subr.mxu0 0.0
          %552 = vmatpush1.msra.mxu0 0.0
          %553 = vmatprep.subr.mxu0 0.0
          %554 = vmatpush1.msra.mxu0 0.0
          %555 = vmatprep.subr.mxu0 0.0
          %556 = vmatpush1.msra.mxu0 0.0
          %557 = vmatprep.subr.mxu0 0.0
          %558 = vmatpush1.msra.mxu0 0.0
          %559 = vmatprep.subr.mxu0 0.0
          %560 = vmatpush1.msra.mxu0 0.0
          %561 = vmatprep.subr.mxu0 0.0
          %562 = vmatpush1.msra.mxu0 %v521
          %563 = vmatprep.subr.mxu0 0.0
          %564 = vmatpush1.msra.mxu0 %v520
          %565 = vmatprep.subr.mxu0 0.0
          %566 = vmatpush2.msra.mxu0 0.0
          %567 = vmatprep.subr.mxu0 0.0
          %568 = vmatpush2.msra.mxu0 0.0
          %569 = vmatprep.subr.mxu0 0.0
          %570 = vmatpush2.msra.mxu0 0.0
          %571 = vmatprep.subr.mxu0 0.0
          %572 = vmatpush2.msra.mxu0 0.0
          %573 = vmatprep.subr.mxu0 0.0
          %574 = vmatpush2.msra.mxu0 0.0
          %575 = vmatprep.subr.mxu0 0.0
          %576 = vmatpush2.msra.mxu0 0.0
          %577 = vmatprep.subr.mxu0 0.0
          %578 = vmatpush2.msra.mxu0 0.0
          %579 = vmatprep.subr.mxu0 0.0
          %580 = vmatpush2.msra.mxu0 0.0
          %581 = vmatprep.subr.mxu0 0.0
          %582 = vmatpush2.msra.mxu0 0.0
          %583 = vmatprep.subr.mxu0 0.0
          %584 = vmatpush2.msra.mxu0 0.0
          %585 = vmatprep.subr.mxu0 0.0
          %586 = vmatpush2.msra.mxu0 0.0
          %587 = vmatprep.subr.mxu0 0.0
          %588 = vmatpush2.msra.mxu0 0.0
          %589 = vmatprep.subr.mxu0 0.0
          %590 = vmatpush2.msra.mxu0 0.0
          %591 = vmatprep.subr.mxu0 0.0
          %592 = vmatpush2.msra.mxu0 0.0
          %593 = vmatprep.subr.mxu0 0.0
          %594 = vmatpush2.msra.mxu0 0.0
          %595 = vmatprep.subr.mxu0 0.0
          %596 = vmatpush2.msra.mxu0 0.0
          %597 = vmatprep.mubr.f32.mxu0 0.0
          %598 = vmatmul.mubr.f32.gmra.mxu0 %v531
          %v599 = vpop.f32.mrf.mxu0
          %v600 = vadd.f32 %v527, %v599
          %v601 = vpop.f32.mrf.mxu0
          %602 = vdwg.mxu0
          %vm603 = vcmask 392192
          %604 = vst.msk [vmem:[%s292] sm:$0xff] %vm603, %v600
        $region56: #{tpu_custom_call.1} parent=39 // pred_fallthru
          _
        %s605 = sand.u32 %s172, 1
        %s606 = scalar_lea.sflag [#allocation5], %s605
        %s607 = sand.u32 %s172, 1
        %s608 = smul.addr %s607, 8
        %s609 = scalar_lea.vmem [#allocation6], %s608
        // Predicated region
        $region57: #{tpu_custom_call.1} parent=39 // pred_check
          %p610 = pneg %p182
        $region58: #{tpu_custom_call.1} parent=39 // pred_check_branch
          %612 = sbr.rel (%p610) target = $region60
        $region59: #{tpu_custom_call.1} parent=39 // pred_region
          %s614 = ssub.s32 128, 128
          %615 = vsyncadd %s606, %s614
          %s616 = sadd.s32 %s28, %s27
          %s617 = smul.addr %s616, 128
          %s618 = scalar_lea.hbm %s5, %s617
          %s620 = sshll.u32 %s609, 4
          %s621 = int_to_ptr.vmem [resolvable:$true] %s620
          %623 = dma.vmem_to_hbm [thread:$0]  %s621, 128, %s618, %s606
        $region60: #{tpu_custom_call.1} parent=39 // pred_fallthru
          _
      $region40: #{tpu_custom_call.1} parent=5 // pred_fallthru
        _
      %p624 = scmp.le.s32.totalorder 2, %s17
      // Predicated region
      $region61: #{tpu_custom_call.1} parent=5 // pred_check
        %p625 = pneg %p624
      $region62: #{tpu_custom_call.1} parent=5 // pred_check_branch
        %627 = sbr.rel (%p625) target = $region64
      $region63: #{tpu_custom_call.1} parent=5 // pred_region
        %s628 = ssub.s32 %s17, 2
        // Predicated region
        $region65: #{tpu_custom_call.1} parent=63 // pred_check
          %p629 = pneg %p188
        $region66: #{tpu_custom_call.1} parent=63 // pred_check_branch
          %631 = sbr.rel (%p629) target = $region68
        $region67: #{tpu_custom_call.1} parent=63 // pred_region
          %s632 = sand.u32 %s173, 1
          %s633 = scalar_lea.sflag [#allocation5], %s632
          %s634 = sand.u32 %s173, 1
          %s635 = smul.addr %s634, 8
          %s636 = scalar_lea.vmem [#allocation6], %s635
          %637 = dma.done %s633, 128
        $region68: #{tpu_custom_call.1} parent=63 // pred_fallthru
          _
      $region64: #{tpu_custom_call.1} parent=5 // pred_fallthru
        _
    $region6: #{tpu_custom_call.1} parent=1 // loop_footer
      %s21 = sadd.s32 1, %s17
    $region7: #{tpu_custom_call.1} parent=1 // loop_footer_branch
      %16 = sbr.rel target = $region3
    $region8: #{tpu_custom_call.1} parent=1 // loop_exit
      _
    %638 = vsyncpa [#allocation4], 1
    %s639 = scalar_lea.sflag [#allocation4], 1
    %640 = vsyncpa %s639, 1
    %641 = vsyncpa [#allocation5], 1
    %s642 = scalar_lea.sflag [#allocation5], 1
    %643 = vsyncpa %s642, 1

</llo_original>
